<compile_context>
chip_gen: v6e
topology: v6e:2x2x1
jax: 0.10.0
libtpu: 0.0.40
codegen_flags: <defaults>
</compile_context>

<pallas_src>
import math
import jax
import jax.numpy as jnp
from jax.experimental import pallas as pl
from jax.experimental.pallas import tpu as pltpu


def _masked_attention_kernel(x_ref, w_ref, b_ref, wc_ref, out_ref):
    # x_ref  : (Bp, S, H)  f32, batch sublane-padded to a multiple of 8 (padded rows zero)
    # w_ref  : (H, 2*Ap)   f32, canonical [K, N]; cols [0:Ap] = (Wq+Wk)^T, [Ap:2Ap] = Wv^T
    # b_ref  : (1, 2*Ap)   f32, [bq+bk ; bv], zero in padded lanes
    # wc_ref : (1, Ap)     f32, context vector, zero in padded lanes
    # out_ref: (Bp, Ap)    f32, sublane- and lane-dense output slab (full unmasked store)
    Bp, S, H = x_ref.shape
    Ap = out_ref.shape[-1]

    # Single canonical [M,K] x [K,N] MXU matmul for the folded (Q+K) and V projections.
    x2 = x_ref[...].reshape(Bp * S, H)                                   # (Bp*S, H)
    y = jnp.dot(x2, w_ref[...], preferred_element_type=jnp.float32) + b_ref[...]
    y = y.reshape(Bp, S, 2 * Ap)                                         # (Bp, S, 2*Ap)

    s = jnp.tanh(y[..., :Ap])            # tanh(q + k)       (Bp, S, Ap)
    v = y[..., Ap:]                      # value projection  (Bp, S, Ap)

    # context_vector linear (A -> 1, no bias): VPU broadcast-mul + XLU lane reduce.
    wc3 = wc_ref[...].reshape(1, 1, Ap)
    scores = jnp.sum(s * wc3, axis=-1, keepdims=True)                    # (Bp, S, 1)

    # Softmax over the sequence axis; normalization folded into the pooled output.
    m = jnp.max(scores, axis=1, keepdims=True)                           # (Bp, 1, 1)
    e = jnp.exp(scores - m)                                              # (Bp, S, 1)
    denom = jnp.sum(e, axis=1, keepdims=True)                            # (Bp, 1, 1)

    # Pooled context: VPU weighted sum over S (M=1 MXU matvecs would be pure
    # fill/drain latency at S=8; revisit only once S is tiled in the hundreds).
    ctx = jnp.sum(e * v, axis=1)                                         # (Bp, Ap)

    # Exact reciprocal: approx=True (~2^-12 rel. err) would exceed the 1e-5 check,
    # and this is O(Bp) work off the critical path anyway.
    out_ref[...] = ctx * pl.reciprocal(denom[:, 0, :], approx=False)


def masked_attention(x, wq, bq, wk, bk, wv, bv, wc):
    """x: (B, S, H) f32. wq/wk/wv: (A, H); bq/bk/bv: (A,); wc: (1, A). Returns (B, A)."""
    B, S, H = x.shape
    A = wq.shape[0]
    Ap = ((A + 127) // 128) * 128            # lane-dense padded attention dim
    Bp = ((B + 7) // 8) * 8                  # sublane-dense padded batch dim

    # mask == ones at init, so weight * mask == weight; fold Q+K exactly.
    w_qk = wq + wk                           # (A, H)
    b_qk = bq + bk                           # (A,)

    def pad_cols_T(w):                       # (A, H) -> (H, Ap): transpose + zero lane pad
        return jnp.pad(w.T, ((0, 0), (0, Ap - A)))

    def pad_vec(b):                          # (A,) -> (Ap,), zero tail
        return jnp.pad(b, (0, Ap - A))

    # Fuse [(Wq+Wk)^T ; Wv^T] into one canonical [K, N] weight -> one MXU matmul.
    w_fused = jnp.concatenate([pad_cols_T(w_qk), pad_cols_T(wv)], axis=1)   # (H, 2*Ap)
    b_fused = jnp.concatenate([pad_vec(b_qk), pad_vec(bv)]).reshape(1, 2 * Ap)
    wc_pad = jnp.pad(wc.reshape(1, A), ((0, 0), (0, Ap - A)))               # (1, Ap)

    # Zero-pad the batch so the kernel's output store is a full unmasked slab.
    # (Padded rows produce finite garbage — uniform softmax over bv — and are sliced off.)
    x_pad = jnp.pad(x, ((0, Bp - B), (0, 0), (0, 0)))

    vmem_spec = pl.BlockSpec(memory_space=pltpu.MemorySpace.VMEM)
    out = pl.pallas_call(
        _masked_attention_kernel,
        out_shape=jax.ShapeDtypeStruct((Bp, Ap), jnp.float32),
        in_specs=[vmem_spec, vmem_spec, vmem_spec, vmem_spec],
        out_specs=vmem_spec,
    )(x_pad, w_fused, b_fused, wc_pad)

    return out[:B, :A]


def _reference(x, wq, bq, wk, bk, wv, bv, wc):
    """Pure-JAX reference mirroring the PyTorch forward (no Q+K folding)."""
    q = jnp.einsum("bsh,ah->bsa", x, wq) + bq
    k = jnp.einsum("bsh,ah->bsa", x, wk) + bk
    v = jnp.einsum("bsh,ah->bsa", x, wv) + bv
    scores = jnp.einsum("bsa,oa->bso", jnp.tanh(q + k), wc)[..., 0]   # (B, S)
    w = jax.nn.softmax(scores, axis=-1)
    return jnp.sum(v * w[..., None], axis=1)                          # (B, A)


def _init_linear_params(key, out_features, in_features, bias=True):
    """Deterministic init mimicking MaskedLinear.reset_parameters (mask == ones)."""
    kw, kb = jax.random.split(key)
    bound_w = 1.0 / math.sqrt(in_features)        # kaiming_uniform(a=sqrt(5)) bound
    w = jax.random.uniform(kw, (out_features, in_features), jnp.float32,
                           -bound_w, bound_w)
    if bias:
        bound_b = 1.0 / math.sqrt(in_features)
        b = jax.random.uniform(kb, (out_features,), jnp.float32, -bound_b, bound_b)
        return w, b
    return w, None


if __name__ == "__main__":
    B, S, H, A = 2, 8, 32, 16   # batch, seq, hidden_dim, attention_dim

    root = jax.random.PRNGKey(0)
    kx, kq, kk, kv, kc = jax.random.split(root, 5)

    x = jax.random.normal(kx, (B, S, H), dtype=jnp.float32)
    wq, bq = _init_linear_params(kq, A, H, bias=True)
    wk, bk = _init_linear_params(kk, A, H, bias=True)
    wv, bv = _init_linear_params(kv, A, H, bias=True)
    wc, _ = _init_linear_params(kc, 1, A, bias=False)   # context_vector: (1, A), no bias

    out = masked_attention(x, wq, bq, wk, bk, wv, bv, wc)
    out = jax.block_until_ready(out)

    ref = _reference(x, wq, bq, wk, bk, wv, bv, wc)
    assert out.shape == (B, A)
    # Slightly looser rtol purely to absorb the (exact-algebra) Q+K weight-folding
    # reassociation in f32.
    assert jnp.allclose(out, ref, atol=1e-5, rtol=1e-4), "mismatch vs reference"

    print("KERNEL_OK")
</pallas_src>

<mosaic_0001>
module attributes {stable_mosaic.version = 11 : i64} {
  func.func @_masked_attention_kernel(%arg0: memref<8x8x32xf32, #tpu.memory_space<vmem>>, %arg1: memref<32x256xf32, #tpu.memory_space<vmem>>, %arg2: memref<1x256xf32, #tpu.memory_space<vmem>>, %arg3: memref<1x128xf32, #tpu.memory_space<vmem>>, %arg4: memref<8x128xf32, #tpu.memory_space<vmem>>) attributes {dimension_semantics = [], scalar_prefetch = 0 : i64, scratch_operands = 0 : i64, tpu.core_type = #tpu.core_type<tc>} {
    %c0 = arith.constant 0 : index
    %c0_0 = arith.constant 0 : index
    %c0_1 = arith.constant 0 : index
    %0 = vector.load %arg0[%c0, %c0_0, %c0_1] : memref<8x8x32xf32, #tpu.memory_space<vmem>>, vector<8x8x32xf32>
    %1 = vector.shape_cast %0 : vector<8x8x32xf32> to vector<64x32xf32>
    %c0_2 = arith.constant 0 : index
    %c0_3 = arith.constant 0 : index
    %2 = vector.load %arg1[%c0_2, %c0_3] : memref<32x256xf32, #tpu.memory_space<vmem>>, vector<32x256xf32>
    %cst = arith.constant dense<0.000000e+00> : vector<64x256xf32>
    %3 = tpu.matmul %1, %2, %cst {dimension_numbers = #tpu.dot_dimension_numbers<[1], [0], [0], [1], [0, 0, 1, 1], [], []>} : vector<64x32xf32>, vector<32x256xf32>, vector<64x256xf32> -> vector<64x256xf32>
    %c0_4 = arith.constant 0 : index
    %c0_5 = arith.constant 0 : index
    %4 = vector.load %arg2[%c0_4, %c0_5] : memref<1x256xf32, #tpu.memory_space<vmem>>, vector<1x256xf32>
    %5 = vector.broadcast %4 : vector<1x256xf32> to vector<64x256xf32>
    %6 = arith.addf %3, %5 : vector<64x256xf32>
    %7 = vector.shape_cast %6 : vector<64x256xf32> to vector<8x8x256xf32>
    %8 = vector.extract_strided_slice %7 {offsets = [0, 0, 0], sizes = [8, 8, 128], strides = [1, 1, 1]} : vector<8x8x256xf32> to vector<8x8x128xf32>
    %9 = math.tanh %8 : vector<8x8x128xf32>
    %10 = vector.extract_strided_slice %7 {offsets = [0, 0, 128], sizes = [8, 8, 128], strides = [1, 1, 1]} : vector<8x8x256xf32> to vector<8x8x128xf32>
    %c0_6 = arith.constant 0 : index
    %c0_7 = arith.constant 0 : index
    %11 = vector.load %arg3[%c0_6, %c0_7] : memref<1x128xf32, #tpu.memory_space<vmem>>, vector<1x128xf32>
    %12 = vector.shape_cast %11 : vector<1x128xf32> to vector<1x1x128xf32>
    %13 = vector.broadcast %12 : vector<1x1x128xf32> to vector<8x8x128xf32>
    %14 = arith.mulf %9, %13 : vector<8x8x128xf32>
    %cst_8 = arith.constant dense<0.000000e+00> : vector<8x8xf32>
    %15 = vector.multi_reduction <add>, %14, %cst_8 [2] : vector<8x8x128xf32> to vector<8x8xf32>
    %16 = vector.shape_cast %15 : vector<8x8xf32> to vector<8x8x1xf32>
    %cst_9 = arith.constant dense<0xFF800000> : vector<8x1xf32>
    %17 = vector.multi_reduction <maximumf>, %16, %cst_9 [1] : vector<8x8x1xf32> to vector<8x1xf32>
    %18 = vector.shape_cast %17 : vector<8x1xf32> to vector<8x1x1xf32>
    %19 = vector.broadcast %18 : vector<8x1x1xf32> to vector<8x8x1xf32>
    %20 = arith.subf %16, %19 : vector<8x8x1xf32>
    %21 = math.exp %20 : vector<8x8x1xf32>
    %cst_10 = arith.constant dense<0.000000e+00> : vector<8x1xf32>
    %22 = vector.multi_reduction <add>, %21, %cst_10 [1] : vector<8x8x1xf32> to vector<8x1xf32>
    %23 = vector.shape_cast %22 : vector<8x1xf32> to vector<8x1x1xf32>
    %24 = vector.broadcast %21 : vector<8x8x1xf32> to vector<8x8x128xf32>
    %25 = arith.mulf %24, %10 : vector<8x8x128xf32>
    %cst_11 = arith.constant dense<0.000000e+00> : vector<8x128xf32>
    %26 = vector.multi_reduction <add>, %25, %cst_11 [1] : vector<8x8x128xf32> to vector<8x128xf32>
    %27 = vector.shape_cast %23 : vector<8x1x1xf32> to vector<8x1xf32>
    %28 = tpu.reciprocal %27 : vector<8x1xf32> -> vector<8x1xf32>
    %29 = vector.broadcast %28 : vector<8x1xf32> to vector<8x128xf32>
    %30 = arith.mulf %26, %29 : vector<8x128xf32>
    %c0_12 = arith.constant 0 : index
    %c0_13 = arith.constant 0 : index
    %31 = vector.load %arg4[%c0_12, %c0_13] : memref<8x128xf32, #tpu.memory_space<vmem>>, vector<8x128xf32>
    tpu.vector_store %arg4[%c0_12, %c0_13], %30 {strides = array<i32>} : memref<8x128xf32, #tpu.memory_space<vmem>>, vector<8x128xf32>,
    return
  }
}

</mosaic_0001>

<llo_original>
// kernel: tpu_custom_call.1
$region0: #{tpu_custom_call.1}
  #allocation0 [shape = 'u32[]', space=smem, size = 0x4, offset = 0x4, fixed_abs, tag = 'smem constant byte address 0x4 - core index']
  #allocation1 [shape = 'u32[144,128]{1,0:T(1,128)}', space=vmem, size = 0x12000, scoped, tag = 'internal scratch']
  %s0 = inlined_call_operand.hbm [shape: f32[8,8,32], index: 0, kind: input, shape index: {}]
  %s1 = inlined_call_operand.hbm [shape: f32[32,256], index: 1, kind: input, shape index: {}]
  %s2 = inlined_call_operand.vmem [shape: f32[1,256], index: 2, kind: input, shape index: {}]
  %s3 = inlined_call_operand.vmem [shape: f32[1,128], index: 3, kind: input, shape index: {}]
  %s4 = inlined_call_operand.hbm [shape: f32[8,128], index: 4, kind: output, shape index: {}]
  %s5 = sld [smem:[#allocation0]]
  $region34: #{tpu_custom_call.1} parent=0
    _
  %s7 = ssub.s32 1, %s5
  %s8 = scalar_select 0, %s7, %s5
  $region1: #{tpu_custom_call.1} parent=0
    #allocation2 [shape = 'u8[32768]{0}', space=vmem, size = 0x8000, scoped, tag = 'input window, operand 0, single buffered']
    #allocation3 [shape = 's32[1]{0}', space=sflag, size = 0x4, scoped, tag = 'scoped memory for tpu_custom_call.1']
    #allocation4 [shape = 's32[1]{0}', space=sflag, size = 0x4, scoped, tag = 'scoped memory for tpu_custom_call.1']
    #allocation5 [shape = 'u8[32768]{0}', space=vmem, size = 0x8000, scoped, tag = 'input window, operand 1, single buffered']
    #allocation6 [shape = 's32[1]{0}', space=sflag, size = 0x4, scoped, tag = 'scoped memory for tpu_custom_call.1']
    #allocation7 [shape = 'u8[4096]{0}', space=vmem, size = 0x1000, scoped, tag = 'output window, operand 0, single buffered']
    %9 = vsyncpa [#allocation3], 0
    %10 = vsyncpa [#allocation6], 0
    %11 = vsyncpa [#allocation4], 0
    // Predicated region
    $region2: #{tpu_custom_call.1} parent=1 // pred_check
      _
    $region3: #{tpu_custom_call.1} parent=1 // pred_check_branch
      %13 = sbr.rel (0) target = $region5
    $region4: #{tpu_custom_call.1} parent=1 // pred_region
      %s15 = ssub.s32 1024, 1024
      %16 = vsyncadd [#allocation3], %s15
      %s17 = sshll.u32 [#allocation2], 4
      %s18 = int_to_ptr.vmem [resolvable:$true] %s17
      %23 = dma.hbm_to_vmem [thread:$0]  %s0, 1024, %s18, [#allocation3], 128, 128, 8
    $region5: #{tpu_custom_call.1} parent=1 // pred_fallthru
      _
    // Predicated region
    $region6: #{tpu_custom_call.1} parent=1 // pred_check
      _
    $region7: #{tpu_custom_call.1} parent=1 // pred_check_branch
      %25 = sbr.rel (0) target = $region9
    $region8: #{tpu_custom_call.1} parent=1 // pred_region
      %s27 = ssub.s32 1024, 1024
      %28 = vsyncadd [#allocation6], %s27
      %s29 = sshll.u32 [#allocation5], 4
      %s30 = int_to_ptr.vmem [resolvable:$true] %s29
      %35 = dma.hbm_to_vmem [thread:$0]  %s1, 1024, %s30, [#allocation6], 256, 256, 16
    $region9: #{tpu_custom_call.1} parent=1 // pred_fallthru
      _
    // Predicated region
    $region10: #{tpu_custom_call.1} parent=1 // pred_check
      _
    $region11: #{tpu_custom_call.1} parent=1 // pred_check_branch
      %37 = sbr.rel (0) target = $region13
    $region12: #{tpu_custom_call.1} parent=1 // pred_region
      _
    $region13: #{tpu_custom_call.1} parent=1 // pred_fallthru
      _
    // Predicated region
    $region14: #{tpu_custom_call.1} parent=1 // pred_check
      _
    $region15: #{tpu_custom_call.1} parent=1 // pred_check_branch
      %39 = sbr.rel (0) target = $region17
    $region16: #{tpu_custom_call.1} parent=1 // pred_region
      _
    $region17: #{tpu_custom_call.1} parent=1 // pred_fallthru
      _
    // Predicated region
    $region18: #{tpu_custom_call.1} parent=1 // pred_check
      _
    $region19: #{tpu_custom_call.1} parent=1 // pred_check_branch
      %41 = sbr.rel (0) target = $region21
    $region20: #{tpu_custom_call.1} parent=1 // pred_region
      %42 = dma.done [#allocation3], 1024
    $region21: #{tpu_custom_call.1} parent=1 // pred_fallthru
      _
    // Predicated region
    $region22: #{tpu_custom_call.1} parent=1 // pred_check
      _
    $region23: #{tpu_custom_call.1} parent=1 // pred_check_branch
      %44 = sbr.rel (0) target = $region25
    $region24: #{tpu_custom_call.1} parent=1 // pred_region
      %45 = dma.done [#allocation6], 1024
    $region25: #{tpu_custom_call.1} parent=1 // pred_fallthru
      _
    %v46 = vld [vmem:[#allocation2] sm:$0xff]
    %v47 = vld [vmem:[#allocation2 + $0x8] sm:$0xff]
    %v48 = vld [vmem:[#allocation2 + $0x10] sm:$0xff]
    %v49 = vld [vmem:[#allocation2 + $0x18] sm:$0xff]
    %v50 = vld [vmem:[#allocation2 + $0x20] sm:$0xff]
    %v51 = vld [vmem:[#allocation2 + $0x28] sm:$0xff]
    %v52 = vld [vmem:[#allocation2 + $0x30] sm:$0xff]
    %v53 = vld [vmem:[#allocation2 + $0x38] sm:$0xff]
    %v54 = vld [vmem:[#allocation5] sm:$0xff]
    %v55 = vld [vmem:[#allocation5 + $0x8] sm:$0xff]
    %v56 = vld [vmem:[#allocation5 + $0x10] sm:$0xff]
    %v57 = vld [vmem:[#allocation5 + $0x18] sm:$0xff]
    %v58 = vld [vmem:[#allocation5 + $0x20] sm:$0xff]
    %v59 = vld [vmem:[#allocation5 + $0x28] sm:$0xff]
    %v60 = vld [vmem:[#allocation5 + $0x30] sm:$0xff]
    %v61 = vld [vmem:[#allocation5 + $0x38] sm:$0xff]
    %v62 = vld [vmem:[%s2] sm:$0x3]
    %v64 = vlaneseq
    %v65 = vshrl.u32 %v64, 7
    %v66 = vsub.s32 0, %v65
    %v67 = vrot.slane %v62, %v66
    %v68 = vlaneseq
    %v69 = vshrl.u32 %v68, 7
    %v70 = vsub.s32 1, %v69
    %v71 = vrot.slane %v62, %v70
    %vm74 = vcmask 261120
    %v76 = vsel %vm74, %v46, 0
    %v79 = vsel %vm74, %v47, 0
    %v82 = vsel %vm74, %v48, 0
    %v85 = vsel %vm74, %v49, 0
    %v88 = vsel %vm74, %v50, 0
    %v91 = vsel %vm74, %v51, 0
    %v94 = vsel %vm74, %v52, 0
    %v97 = vsel %vm74, %v53, 0
    %99 = vmatprep.subr.mxu0 0.0
    %100 = vmatpush1.msra.mxu0 0.0
    %101 = vmatprep.subr.mxu0 0.0
    %102 = vmatpush1.msra.mxu0 0.0
    %103 = vmatprep.subr.mxu0 0.0
    %104 = vmatpush1.msra.mxu0 0.0
    %105 = vmatprep.subr.mxu0 0.0
    %106 = vmatpush1.msra.mxu0 0.0
    %107 = vmatprep.subr.mxu0 0.0
    %108 = vmatpush1.msra.mxu0 0.0
    %109 = vmatprep.subr.mxu0 0.0
    %110 = vmatpush1.msra.mxu0 0.0
    %111 = vmatprep.subr.mxu0 0.0
    %112 = vmatpush1.msra.mxu0 0.0
    %113 = vmatprep.subr.mxu0 0.0
    %114 = vmatpush1.msra.mxu0 0.0
    %115 = vmatprep.subr.mxu0 0.0
    %116 = vmatpush1.msra.mxu0 0.0
    %117 = vmatprep.subr.mxu0 0.0
    %118 = vmatpush1.msra.mxu0 0.0
    %119 = vmatprep.subr.mxu0 0.0
    %120 = vmatpush1.msra.mxu0 0.0
    %121 = vmatprep.subr.mxu0 0.0
    %122 = vmatpush1.msra.mxu0 0.0
    %123 = vmatprep.subr.mxu0 %v61
    %124 = vmatpush1.msra.mxu0 %v60
    %125 = vmatprep.subr.mxu0 %v59
    %126 = vmatpush1.msra.mxu0 %v58
    %127 = vmatprep.subr.mxu0 %v57
    %128 = vmatpush1.msra.mxu0 %v56
    %129 = vmatprep.subr.mxu0 %v55
    %130 = vmatpush1.msra.mxu0 %v54
    %131 = vmatprep.subr.mxu0 0.0
    %132 = vmatpush2.msra.mxu0 0.0
    %133 = vmatprep.subr.mxu0 0.0
    %134 = vmatpush2.msra.mxu0 0.0
    %135 = vmatprep.subr.mxu0 0.0
    %136 = vmatpush2.msra.mxu0 0.0
    %137 = vmatprep.subr.mxu0 0.0
    %138 = vmatpush2.msra.mxu0 0.0
    %139 = vmatprep.subr.mxu0 0.0
    %140 = vmatpush2.msra.mxu0 0.0
    %141 = vmatprep.subr.mxu0 0.0
    %142 = vmatpush2.msra.mxu0 0.0
    %143 = vmatprep.subr.mxu0 0.0
    %144 = vmatpush2.msra.mxu0 0.0
    %145 = vmatprep.subr.mxu0 0.0
    %146 = vmatpush2.msra.mxu0 0.0
    %147 = vmatprep.subr.mxu0 0.0
    %148 = vmatpush2.msra.mxu0 0.0
    %149 = vmatprep.subr.mxu0 0.0
    %150 = vmatpush2.msra.mxu0 0.0
    %151 = vmatprep.subr.mxu0 0.0
    %152 = vmatpush2.msra.mxu0 0.0
    %153 = vmatprep.subr.mxu0 0.0
    %154 = vmatpush2.msra.mxu0 0.0
    %155 = vmatprep.subr.mxu0 0.0
    %156 = vmatpush2.msra.mxu0 0.0
    %157 = vmatprep.subr.mxu0 0.0
    %158 = vmatpush2.msra.mxu0 0.0
    %159 = vmatprep.subr.mxu0 0.0
    %160 = vmatpush2.msra.mxu0 0.0
    %161 = vmatprep.subr.mxu0 0.0
    %162 = vmatpush2.msra.mxu0 0.0
    %163 = vmatprep.mubr.f32.mxu0 0.0
    %164 = vmatmul.mubr.f32.gmra.mxu0 %v76
    %v165 = vpop.f32.mrf.mxu0
    %v166 = vadd.f32 %v67, %v165
    %v167 = vpop.f32.mrf.mxu0
    %v168 = vadd.f32 %v71, %v167
    %169 = vmatprep.mubr.f32.mxu0 0.0
    %170 = vmatmul.mubr.f32.gmra.mxu0 %v79
    %v171 = vpop.f32.mrf.mxu0
    %v172 = vadd.f32 %v67, %v171
    %v173 = vpop.f32.mrf.mxu0
    %v174 = vadd.f32 %v71, %v173
    %175 = vmatprep.mubr.f32.mxu0 0.0
    %176 = vmatmul.mubr.f32.gmra.mxu0 %v82
    %v177 = vpop.f32.mrf.mxu0
    %v178 = vadd.f32 %v67, %v177
    %v179 = vpop.f32.mrf.mxu0
    %v180 = vadd.f32 %v71, %v179
    %181 = vmatprep.mubr.f32.mxu0 0.0
    %182 = vmatmul.mubr.f32.gmra.mxu0 %v85
    %v183 = vpop.f32.mrf.mxu0
    %v184 = vadd.f32 %v67, %v183
    %v185 = vpop.f32.mrf.mxu0
    %v186 = vadd.f32 %v71, %v185
    %187 = vmatprep.mubr.f32.mxu0 0.0
    %188 = vmatmul.mubr.f32.gmra.mxu0 %v88
    %v189 = vpop.f32.mrf.mxu0
    %v190 = vadd.f32 %v67, %v189
    %v191 = vpop.f32.mrf.mxu0
    %v192 = vadd.f32 %v71, %v191
    %193 = vmatprep.mubr.f32.mxu0 0.0
    %194 = vmatmul.mubr.f32.gmra.mxu0 %v91
    %v195 = vpop.f32.mrf.mxu0
    %v196 = vadd.f32 %v67, %v195
    %v197 = vpop.f32.mrf.mxu0
    %v198 = vadd.f32 %v71, %v197
    %199 = vmatprep.mubr.f32.mxu0 0.0
    %200 = vmatmul.mubr.f32.gmra.mxu0 %v94
    %v201 = vpop.f32.mrf.mxu0
    %v202 = vadd.f32 %v67, %v201
    %v203 = vpop.f32.mrf.mxu0
    %v204 = vadd.f32 %v71, %v203
    %205 = vmatprep.mubr.f32.mxu0 0.0
    %206 = vmatmul.mubr.f32.gmra.mxu0 %v97
    %v207 = vpop.f32.mrf.mxu0
    %v208 = vadd.f32 %v67, %v207
    %v209 = vpop.f32.mrf.mxu0
    %v210 = vadd.f32 %v71, %v209
    %211 = vdwg.mxu0
    %v212 = vtanh.pop %v166
    %v213 = vtanh.pop %v172
    %v214 = vtanh.pop %v178
    %v215 = vtanh.pop %v184
    %v216 = vtanh.pop %v190
    %v217 = vtanh.pop %v196
    %v218 = vtanh.pop %v202
    %v219 = vtanh.pop %v208
    %v220 = vld [vmem:[%s3] sm:$0x1]
    %v222 = vlaneseq
    %v223 = vshrl.u32 %v222, 7
    %v224 = vsub.s32 0, %v223
    %v225 = vrot.slane %v220, %v224
    %v227 = vmul.f32 %v212, %v225
    %v228 = vmul.f32 %v213, %v225
    %v229 = vmul.f32 %v214, %v225
    %v230 = vmul.f32 %v215, %v225
    %v231 = vmul.f32 %v216, %v225
    %v232 = vmul.f32 %v217, %v225
    %v233 = vmul.f32 %v218, %v225
    %v234 = vmul.f32 %v219, %v225
    %235 = vadd.xlane.f32.xlu0 %v227
    %v236 = vpop.xlane.xlu0 %235
    %237 = vadd.xlane.f32.xlu0 %v228
    %v238 = vpop.xlane.xlu0 %237
    %239 = vadd.xlane.f32.xlu0 %v229
    %v240 = vpop.xlane.xlu0 %239
    %241 = vadd.xlane.f32.xlu0 %v230
    %v242 = vpop.xlane.xlu0 %241
    %243 = vadd.xlane.f32.xlu0 %v231
    %v244 = vpop.xlane.xlu0 %243
    %245 = vadd.xlane.f32.xlu0 %v232
    %v246 = vpop.xlane.xlu0 %245
    %247 = vadd.xlane.f32.xlu0 %v233
    %v248 = vpop.xlane.xlu0 %247
    %249 = vadd.xlane.f32.xlu0 %v234
    %v250 = vpop.xlane.xlu0 %249
    %v251 = vrot.slane %v236, 4
    %v252 = vmax.f32 %v236, %v251
    %v253 = vrot.slane %v252, 2
    %v254 = vmax.f32 %v252, %v253
    %v255 = vrot.slane %v254, 1
    %v256 = vmax.f32 %v254, %v255
    %v257 = vrot.slane %v238, 4
    %v258 = vmax.f32 %v238, %v257
    %v259 = vrot.slane %v258, 2
    %v260 = vmax.f32 %v258, %v259
    %v261 = vrot.slane %v260, 1
    %v262 = vmax.f32 %v260, %v261
    %v263 = vrot.slane %v240, 4
    %v264 = vmax.f32 %v240, %v263
    %v265 = vrot.slane %v264, 2
    %v266 = vmax.f32 %v264, %v265
    %v267 = vrot.slane %v266, 1
    %v268 = vmax.f32 %v266, %v267
    %v269 = vrot.slane %v242, 4
    %v270 = vmax.f32 %v242, %v269
    %v271 = vrot.slane %v270, 2
    %v272 = vmax.f32 %v270, %v271
    %v273 = vrot.slane %v272, 1
    %v274 = vmax.f32 %v272, %v273
    %v275 = vrot.slane %v244, 4
    %v276 = vmax.f32 %v244, %v275
    %v277 = vrot.slane %v276, 2
    %v278 = vmax.f32 %v276, %v277
    %v279 = vrot.slane %v278, 1
    %v280 = vmax.f32 %v278, %v279
    %v281 = vrot.slane %v246, 4
    %v282 = vmax.f32 %v246, %v281
    %v283 = vrot.slane %v282, 2
    %v284 = vmax.f32 %v282, %v283
    %v285 = vrot.slane %v284, 1
    %v286 = vmax.f32 %v284, %v285
    %v287 = vrot.slane %v248, 4
    %v288 = vmax.f32 %v248, %v287
    %v289 = vrot.slane %v288, 2
    %v290 = vmax.f32 %v288, %v289
    %v291 = vrot.slane %v290, 1
    %v292 = vmax.f32 %v290, %v291
    %v293 = vrot.slane %v250, 4
    %v294 = vmax.f32 %v250, %v293
    %v295 = vrot.slane %v294, 2
    %v296 = vmax.f32 %v294, %v295
    %v297 = vrot.slane %v296, 1
    %v298 = vmax.f32 %v296, %v297
    %v299 = vsub.f32 %v236, %v256
    %v300 = vsub.f32 %v238, %v262
    %v301 = vsub.f32 %v240, %v268
    %v302 = vsub.f32 %v242, %v274
    %v303 = vsub.f32 %v244, %v280
    %v304 = vsub.f32 %v246, %v286
    %v305 = vsub.f32 %v248, %v292
    %v306 = vsub.f32 %v250, %v298
    %v307 = vmul.f32 %v299, 1.442695
    %v308 = vpow.pop %v307
    %v309 = vmul.f32 %v300, 1.442695
    %v310 = vpow.pop %v309
    %v311 = vmul.f32 %v301, 1.442695
    %v312 = vpow.pop %v311
    %v313 = vmul.f32 %v302, 1.442695
    %v314 = vpow.pop %v313
    %v315 = vmul.f32 %v303, 1.442695
    %v316 = vpow.pop %v315
    %v317 = vmul.f32 %v304, 1.442695
    %v318 = vpow.pop %v317
    %v319 = vmul.f32 %v305, 1.442695
    %v320 = vpow.pop %v319
    %v321 = vmul.f32 %v306, 1.442695
    %v322 = vpow.pop %v321
    %v323 = vrot.slane %v308, 4
    %v324 = vadd.f32 %v308, %v323
    %v325 = vrot.slane %v324, 2
    %v326 = vadd.f32 %v324, %v325
    %v327 = vrot.slane %v326, 1
    %v328 = vadd.f32 %v326, %v327
    %v329 = vrot.slane %v310, 4
    %v330 = vadd.f32 %v310, %v329
    %v331 = vrot.slane %v330, 2
    %v332 = vadd.f32 %v330, %v331
    %v333 = vrot.slane %v332, 1
    %v334 = vadd.f32 %v332, %v333
    %v335 = vrot.slane %v312, 4
    %v336 = vadd.f32 %v312, %v335
    %v337 = vrot.slane %v336, 2
    %v338 = vadd.f32 %v336, %v337
    %v339 = vrot.slane %v338, 1
    %v340 = vadd.f32 %v338, %v339
    %v341 = vrot.slane %v314, 4
    %v342 = vadd.f32 %v314, %v341
    %v343 = vrot.slane %v342, 2
    %v344 = vadd.f32 %v342, %v343
    %v345 = vrot.slane %v344, 1
    %v346 = vadd.f32 %v344, %v345
    %v347 = vrot.slane %v316, 4
    %v348 = vadd.f32 %v316, %v347
    %v349 = vrot.slane %v348, 2
    %v350 = vadd.f32 %v348, %v349
    %v351 = vrot.slane %v350, 1
    %v352 = vadd.f32 %v350, %v351
    %v353 = vrot.slane %v318, 4
    %v354 = vadd.f32 %v318, %v353
    %v355 = vrot.slane %v354, 2
    %v356 = vadd.f32 %v354, %v355
    %v357 = vrot.slane %v356, 1
    %v358 = vadd.f32 %v356, %v357
    %v359 = vrot.slane %v320, 4
    %v360 = vadd.f32 %v320, %v359
    %v361 = vrot.slane %v360, 2
    %v362 = vadd.f32 %v360, %v361
    %v363 = vrot.slane %v362, 1
    %v364 = vadd.f32 %v362, %v363
    %v365 = vrot.slane %v322, 4
    %v366 = vadd.f32 %v322, %v365
    %v367 = vrot.slane %v366, 2
    %v368 = vadd.f32 %v366, %v367
    %v369 = vrot.slane %v368, 1
    %v370 = vadd.f32 %v368, %v369
    %v371 = vmul.f32 %v308, %v168
    %v372 = vmul.f32 %v310, %v174
    %v373 = vmul.f32 %v312, %v180
    %v374 = vmul.f32 %v314, %v186
    %v375 = vmul.f32 %v316, %v192
    %v376 = vmul.f32 %v318, %v198
    %v377 = vmul.f32 %v320, %v204
    %v378 = vmul.f32 %v322, %v210
    %v379 = vrot.slane %v371, 4
    %v380 = vadd.f32 %v371, %v379
    %v381 = vrot.slane %v380, 2
    %v382 = vadd.f32 %v380, %v381
    %v383 = vrot.slane %v382, 1
    %v384 = vadd.f32 %v382, %v383
    %v385 = vrot.slane %v372, 4
    %v386 = vadd.f32 %v372, %v385
    %v387 = vrot.slane %v386, 2
    %v388 = vadd.f32 %v386, %v387
    %v389 = vrot.slane %v388, 1
    %v390 = vadd.f32 %v388, %v389
    %v391 = vrot.slane %v373, 4
    %v392 = vadd.f32 %v373, %v391
    %v393 = vrot.slane %v392, 2
    %v394 = vadd.f32 %v392, %v393
    %v395 = vrot.slane %v394, 1
    %v396 = vadd.f32 %v394, %v395
    %v397 = vrot.slane %v374, 4
    %v398 = vadd.f32 %v374, %v397
    %v399 = vrot.slane %v398, 2
    %v400 = vadd.f32 %v398, %v399
    %v401 = vrot.slane %v400, 1
    %v402 = vadd.f32 %v400, %v401
    %v403 = vrot.slane %v375, 4
    %v404 = vadd.f32 %v375, %v403
    %v405 = vrot.slane %v404, 2
    %v406 = vadd.f32 %v404, %v405
    %v407 = vrot.slane %v406, 1
    %v408 = vadd.f32 %v406, %v407
    %v409 = vrot.slane %v376, 4
    %v410 = vadd.f32 %v376, %v409
    %v411 = vrot.slane %v410, 2
    %v412 = vadd.f32 %v410, %v411
    %v413 = vrot.slane %v412, 1
    %v414 = vadd.f32 %v412, %v413
    %v415 = vrot.slane %v377, 4
    %v416 = vadd.f32 %v377, %v415
    %v417 = vrot.slane %v416, 2
    %v418 = vadd.f32 %v416, %v417
    %v419 = vrot.slane %v418, 1
    %v420 = vadd.f32 %v418, %v419
    %v421 = vrot.slane %v378, 4
    %v422 = vadd.f32 %v378, %v421
    %v423 = vrot.slane %v422, 2
    %v424 = vadd.f32 %v422, %v423
    %v425 = vrot.slane %v424, 1
    %v426 = vadd.f32 %v424, %v425
    %v427 = vrcp.pop %v328
    %v428 = vrcp.pop %v334
    %v429 = vrcp.pop %v340
    %v430 = vrcp.pop %v346
    %v431 = vrcp.pop %v352
    %v432 = vrcp.pop %v358
    %v433 = vrcp.pop %v364
    %v434 = vrcp.pop %v370
    %v435 = vmul.f32 %v384, %v427
    %v436 = vmul.f32 %v390, %v428
    %v437 = vmul.f32 %v396, %v429
    %v438 = vmul.f32 %v402, %v430
    %v439 = vmul.f32 %v408, %v431
    %v440 = vmul.f32 %v414, %v432
    %v441 = vmul.f32 %v420, %v433
    %v442 = vmul.f32 %v426, %v434
    %vm451 = vcmask 1041409
    %v452 = vsel %vm451, %v436, %v435
    %vm453 = vcmask 1042434
    %v454 = vsel %vm453, %v437, %v452
    %vm455 = vcmask 1043459
    %v456 = vsel %vm455, %v438, %v454
    %vm457 = vcmask 1044484
    %v458 = vsel %vm457, %v439, %v456
    %vm459 = vcmask 1045509
    %v460 = vsel %vm459, %v440, %v458
    %vm461 = vcmask 1046534
    %v462 = vsel %vm461, %v441, %v460
    %vm463 = vcmask 1047559
    %v464 = vsel %vm463, %v442, %v462
    %466 = vst [vmem:[#allocation7] sm:$0xff] %v464
    // Predicated region
    $region26: #{tpu_custom_call.1} parent=1 // pred_check
      _
    $region27: #{tpu_custom_call.1} parent=1 // pred_check_branch
      %468 = sbr.rel (0) target = $region29
    $region28: #{tpu_custom_call.1} parent=1 // pred_region
      %s470 = ssub.s32 128, 128
      %471 = vsyncadd [#allocation4], %s470
      %s473 = sshll.u32 [#allocation7], 4
      %s474 = int_to_ptr.vmem [resolvable:$true] %s473
      %476 = dma.vmem_to_hbm [thread:$0]  %s474, 128, %s4, [#allocation4]
    $region29: #{tpu_custom_call.1} parent=1 // pred_fallthru
      _
    // Predicated region
    $region30: #{tpu_custom_call.1} parent=1 // pred_check
      _
    $region31: #{tpu_custom_call.1} parent=1 // pred_check_branch
      %478 = sbr.rel (0) target = $region33
    $region32: #{tpu_custom_call.1} parent=1 // pred_region
      %479 = dma.done [#allocation4], 128
    $region33: #{tpu_custom_call.1} parent=1 // pred_fallthru
      _
    %480 = vsyncpa [#allocation3], 1
    %481 = vsyncpa [#allocation6], 1
    %482 = vsyncpa [#allocation4], 1

</llo_original>
